<compile_context>
chip_gen: v5e
topology: v5e:2x2
jax: 0.10.0
libtpu: 0.0.40
codegen_flags: <defaults>
</compile_context>

<pallas_src>
import jax
import jax.numpy as jnp
from jax import lax
from jax.experimental import pallas as pl
from jax.experimental.pallas import tpu as pltpu

# ---- model hyper-params (small, consistent with the module) ----
B = 2          # batch
T = 16         # sequence length
BT = B * T
IDIM = 32      # input dim
NCHANS = 64    # conv channels
K = 3          # kernel size
PAD = K // 2   # SAME padding
EDIT = 1       # to_be_edited_size
NHEAD = 1 + EDIT
LN_EPS = 1e-12

# row offsets inside the packed weight slab (all multiples of 8 sublanes)
W1_OFF = 0                      # (K*IDIM,   NCHANS) = (96, 64)
W2_OFF = K * IDIM               # (K*NCHANS, NCHANS) = (192, 64)
WH_OFF = K * IDIM + K * NCHANS  # (NCHANS,   NCHANS) = (64, 64), heads zero-padded
WSLAB_ROWS = WH_OFF + NCHANS    # 352


def _layernorm(h, gamma, beta):
    # LayerNorm over the channel (last) dim; two-pass variance for robustness.
    mean = jnp.mean(h, axis=-1, keepdims=True)
    d = h - mean
    var = jnp.mean(d * d, axis=-1, keepdims=True)
    return d * lax.rsqrt(var + LN_EPS) * gamma + beta


def dp_kernel(x_ref, npad_ref, wslab_ref, vslab_ref, out_ref):
    x = x_ref[...]                       # (BT, IDIM)
    npad = npad_ref[...]                 # (BT, 1)
    v = vslab_ref[...]                   # (8, NCHANS) packed vectors
    b1, g1, be1 = v[0:1, :], v[1:2, :], v[2:3, :]
    b2, g2, be2 = v[3:4, :], v[4:5, :], v[5:6, :]
    bh = v[6:7, :]

    # hoisted mask broadcast, reused by both conv layers
    npad_b = jnp.broadcast_to(npad, (BT, NCHANS))

    # per-batch boundary masks for the shifted taps (rows are b*T + t)
    row = lax.broadcasted_iota(jnp.int32, (BT, 1), 0)
    t_in_batch = row % T
    not_first = t_in_batch != 0          # t == 0  -> x[t-1] is zero padding
    not_last = t_in_batch != (T - 1)     # t == T-1 -> x[t+1] is zero padding

    def conv_same(h, c_in, w_off):
        # Conv1d(c_in -> NCHANS, K=3, SAME) as K accumulated MXU matmuls.
        w0 = wslab_ref[w_off:w_off + c_in, :]
        w1 = wslab_ref[w_off + c_in:w_off + 2 * c_in, :]
        w2 = wslab_ref[w_off + 2 * c_in:w_off + 3 * c_in, :]
        h_prev = jnp.where(not_first, pltpu.roll(h, 1, 0), 0.0)        # x[t-1]
        h_next = jnp.where(not_last, pltpu.roll(h, BT - 1, 0), 0.0)    # x[t+1]
        y = jnp.dot(h_prev, w0, preferred_element_type=jnp.float32)
        y = y + jnp.dot(h, w1, preferred_element_type=jnp.float32)
        y = y + jnp.dot(h_next, w2, preferred_element_type=jnp.float32)
        return y

    # ---- conv block 1 ----
    h = conv_same(x, IDIM, W1_OFF) + b1
    h = jnp.maximum(h, 0.0)
    h = _layernorm(h, g1, be1)
    # dropout: identity (eval mode); padding mask
    h = h * npad_b                                                      # (BT, NCHANS)

    # ---- conv block 2 ----
    h2 = conv_same(h, NCHANS, W2_OFF) + b2
    h2 = jnp.maximum(h2, 0.0)
    h2 = _layernorm(h2, g2, be2)
    h2 = h2 * npad_b                                                    # (BT, NCHANS)

    # ---- fused output heads (werdur | edit), zero-padded to NCHANS lanes ----
    whp = wslab_ref[WH_OFF:WH_OFF + NCHANS, :]
    heads = jnp.dot(h2, whp, preferred_element_type=jnp.float32) + bh   # (BT, NCHANS)
    out_ref[...] = heads[:, :NHEAD] * npad                               # (BT, NHEAD)


def pack_params(params):
    """One-time host-side packing of all parameters into two slabs."""
    w1c = params["w1"].reshape(K * IDIM, NCHANS)      # (96, 64)
    w2c = params["w2"].reshape(K * NCHANS, NCHANS)    # (192, 64)
    whp = jnp.zeros((NCHANS, NCHANS), jnp.float32)
    whp = whp.at[:, 0:1].set(params["wd_w"])
    whp = whp.at[:, 1:1 + EDIT].set(params["ed_w"])
    wslab = jnp.concatenate([w1c, w2c, whp], axis=0)  # (352, 64)

    bh = jnp.zeros((1, NCHANS), jnp.float32)
    bh = bh.at[:, 0:1].set(params["wd_b"])
    bh = bh.at[:, 1:1 + EDIT].set(params["ed_b"])
    vslab = jnp.concatenate(
        [params["b1"], params["g1"], params["be1"],
         params["b2"], params["g2"], params["be2"],
         bh, jnp.zeros((1, NCHANS), jnp.float32)], axis=0)  # (8, 64)
    return {"wslab": wslab, "vslab": vslab}


def duration_predictor_forward(xs, x_nonpadding, packed):
    """xs: (B, T, IDIM) float32;  x_nonpadding: (B, T) float32."""
    xf = xs.reshape(BT, IDIM).astype(jnp.float32)
    npad = x_nonpadding.reshape(BT, 1).astype(jnp.float32)

    vmem = pl.BlockSpec(memory_space=pltpu.MemorySpace.VMEM)
    out = pl.pallas_call(
        dp_kernel,
        out_shape=jax.ShapeDtypeStruct((BT, NHEAD), jnp.float32),
        in_specs=[vmem] * 4,
        out_specs=vmem,
    )(xf, npad, packed["wslab"], packed["vslab"])
    # TODO(synk): if B*T grows beyond toy size, add a 1-D row-block grid with
    # dimension_semantics=("parallel",) to use both v7x TensorCores.

    out = out.reshape(B, T, NHEAD)
    return out[..., :1], out[..., 1:]


def reference_forward(xs, x_nonpadding, params):
    """Pure-JAX reference matching the PyTorch semantics."""
    npad3 = x_nonpadding[:, :, None]
    h = xs
    layers = [
        (params["w1"], params["b1"], params["g1"], params["be1"]),
        (params["w2"], params["b2"], params["g2"], params["be2"]),
    ]
    for (w, b, g, be) in layers:
        hp = jnp.pad(h, ((0, 0), (PAD, PAD), (0, 0)))
        y = sum(jnp.einsum("bti,io->bto", hp[:, k:k + T, :], w[k]) for k in range(K))
        y = y + b[0]
        y = jax.nn.relu(y)
        mean = y.mean(-1, keepdims=True)
        var = ((y - mean) ** 2).mean(-1, keepdims=True)
        y = (y - mean) / jnp.sqrt(var + LN_EPS) * g[0] + be[0]
        h = y * npad3
    werdur = (h @ params["wd_w"] + params["wd_b"][0]) * npad3
    edit = (h @ params["ed_w"] + params["ed_b"][0]) * npad3
    return werdur, edit


def make_params(key):
    ks = jax.random.split(key, 12)
    p = {
        # conv weights stored (K, C_in, C_out)  (torch Conv1d weight is (C_out, C_in, K))
        "w1": 0.1 * jax.random.normal(ks[0], (K, IDIM, NCHANS), jnp.float32),
        "b1": 0.1 * jax.random.normal(ks[1], (1, NCHANS), jnp.float32),
        "g1": jnp.ones((1, NCHANS), jnp.float32),
        "be1": jnp.zeros((1, NCHANS), jnp.float32),
        "w2": 0.1 * jax.random.normal(ks[2], (K, NCHANS, NCHANS), jnp.float32),
        "b2": 0.1 * jax.random.normal(ks[3], (1, NCHANS), jnp.float32),
        "g2": 1.0 + 0.1 * jax.random.normal(ks[4], (1, NCHANS), jnp.float32),
        "be2": 0.1 * jax.random.normal(ks[5], (1, NCHANS), jnp.float32),
        "wd_w": 0.1 * jax.random.normal(ks[6], (NCHANS, 1), jnp.float32),
        "wd_b": 0.1 * jax.random.normal(ks[7], (1, 1), jnp.float32),
        "ed_w": 0.1 * jax.random.normal(ks[8], (NCHANS, EDIT), jnp.float32),
        "ed_b": 0.1 * jax.random.normal(ks[9], (1, EDIT), jnp.float32),
    }
    return p


if __name__ == "__main__":
    key = jax.random.PRNGKey(0)
    k_x, k_p = jax.random.split(key)
    xs = jax.random.normal(k_x, (B, T, IDIM), jnp.float32)
    # nonpadding mask with some trailing zeros
    x_nonpadding = jnp.concatenate(
        [jnp.ones((B, T - 3), jnp.float32), jnp.zeros((B, 3), jnp.float32)], axis=1)
    params = make_params(k_p)
    packed = pack_params(params)          # one-time packing, outside the hot path

    werdur, edit = duration_predictor_forward(xs, x_nonpadding, packed)
    werdur = jax.block_until_ready(werdur)
    edit = jax.block_until_ready(edit)

    werdur_ref, edit_ref = reference_forward(xs, x_nonpadding, params)
    assert werdur.shape == (B, T, 1) and edit.shape == (B, T, EDIT)
    assert jnp.allclose(werdur, werdur_ref, atol=1e-4, rtol=1e-4)
    assert jnp.allclose(edit, edit_ref, atol=1e-4, rtol=1e-4)
    print("KERNEL_OK")
</pallas_src>

<mosaic_0001>
module attributes {stable_mosaic.version = 11 : i64} {
  func.func @dp_kernel(%arg0: memref<32x32xf32, #tpu.memory_space<vmem>>, %arg1: memref<32x1xf32, #tpu.memory_space<vmem>>, %arg2: memref<352x64xf32, #tpu.memory_space<vmem>>, %arg3: memref<8x64xf32, #tpu.memory_space<vmem>>, %arg4: memref<32x2xf32, #tpu.memory_space<vmem>>) attributes {dimension_semantics = [], scalar_prefetch = 0 : i64, scratch_operands = 0 : i64, tpu.core_type = #tpu.core_type<tc>} {
    %c0 = arith.constant 0 : index
    %c0_0 = arith.constant 0 : index
    %0 = vector.load %arg0[%c0, %c0_0] : memref<32x32xf32, #tpu.memory_space<vmem>>, vector<32x32xf32>
    %c0_1 = arith.constant 0 : index
    %c0_2 = arith.constant 0 : index
    %1 = vector.load %arg1[%c0_1, %c0_2] : memref<32x1xf32, #tpu.memory_space<vmem>>, vector<32x1xf32>
    %c0_3 = arith.constant 0 : index
    %c0_4 = arith.constant 0 : index
    %2 = vector.load %arg3[%c0_3, %c0_4] : memref<8x64xf32, #tpu.memory_space<vmem>>, vector<8x64xf32>
    %3 = vector.extract_strided_slice %2 {offsets = [0, 0], sizes = [1, 64], strides = [1, 1]} : vector<8x64xf32> to vector<1x64xf32>
    %4 = vector.extract_strided_slice %2 {offsets = [1, 0], sizes = [1, 64], strides = [1, 1]} : vector<8x64xf32> to vector<1x64xf32>
    %5 = vector.extract_strided_slice %2 {offsets = [2, 0], sizes = [1, 64], strides = [1, 1]} : vector<8x64xf32> to vector<1x64xf32>
    %6 = vector.extract_strided_slice %2 {offsets = [3, 0], sizes = [1, 64], strides = [1, 1]} : vector<8x64xf32> to vector<1x64xf32>
    %7 = vector.extract_strided_slice %2 {offsets = [4, 0], sizes = [1, 64], strides = [1, 1]} : vector<8x64xf32> to vector<1x64xf32>
    %8 = vector.extract_strided_slice %2 {offsets = [5, 0], sizes = [1, 64], strides = [1, 1]} : vector<8x64xf32> to vector<1x64xf32>
    %9 = vector.extract_strided_slice %2 {offsets = [6, 0], sizes = [1, 64], strides = [1, 1]} : vector<8x64xf32> to vector<1x64xf32>
    %10 = vector.shape_cast %1 : vector<32x1xf32> to vector<32x1xf32>
    %11 = vector.broadcast %10 : vector<32x1xf32> to vector<32x64xf32>
    %12 = tpu.iota {dimensions = array<i32: 0>} : vector<32x1xi32>
    %c16_i32 = arith.constant 16 : i32
    %c0_i32 = arith.constant 0 : i32
    %13 = arith.cmpi eq, %c16_i32, %c0_i32 : i32
    %c1_i32 = arith.constant 1 : i32
    %14 = arith.select %13, %c1_i32, %c16_i32 : i32
    %15 = vector.broadcast %14 : i32 to vector<32x1xi32>
    %16 = arith.remsi %12, %15 : vector<32x1xi32>
    %c0_i32_5 = arith.constant 0 : i32
    %17 = vector.broadcast %c0_i32_5 : i32 to vector<32x1xi32>
    %18 = arith.cmpi ne, %16, %17 : vector<32x1xi32>
    %c0_i32_6 = arith.constant 0 : i32
    %19 = vector.broadcast %c0_i32_6 : i32 to vector<32x1xi32>
    %20 = arith.cmpi slt, %16, %19 : vector<32x1xi32>
    %c0_i32_7 = arith.constant 0 : i32
    %21 = arith.cmpi slt, %14, %c0_i32_7 : i32
    %22 = vector.broadcast %21 : i1 to vector<32x1xi1>
    %23 = vector.broadcast %22 : vector<32x1xi1> to vector<32x1xi1>
    %24 = arith.xori %20, %23 : vector<32x1xi1>
    %25 = arith.andi %24, %18 : vector<32x1xi1>
    %26 = vector.broadcast %14 : i32 to vector<32x1xi32>
    %27 = arith.addi %16, %26 : vector<32x1xi32>
    %28 = arith.select %25, %27, %16 : vector<32x1xi1>, vector<32x1xi32>
    %c0_i32_8 = arith.constant 0 : i32
    %29 = vector.broadcast %c0_i32_8 : i32 to vector<32x1xi32>
    %30 = arith.cmpi ne, %28, %29 : vector<32x1xi32>
    %c15_i32 = arith.constant 15 : i32
    %31 = vector.broadcast %c15_i32 : i32 to vector<32x1xi32>
    %32 = arith.cmpi ne, %28, %31 : vector<32x1xi32>
    %c0_9 = arith.constant 0 : index
    %c0_10 = arith.constant 0 : index
    %33 = vector.load %arg2[%c0_9, %c0_10] : memref<352x64xf32, #tpu.memory_space<vmem>>, vector<32x64xf32>
    %c32 = arith.constant 32 : index
    %c0_11 = arith.constant 0 : index
    %34 = vector.load %arg2[%c32, %c0_11] : memref<352x64xf32, #tpu.memory_space<vmem>>, vector<32x64xf32>
    %c64 = arith.constant 64 : index
    %c0_12 = arith.constant 0 : index
    %35 = vector.load %arg2[%c64, %c0_12] : memref<352x64xf32, #tpu.memory_space<vmem>>, vector<32x64xf32>
    %c1_i32_13 = arith.constant 1 : i32
    %36 = tpu.dynamic_rotate %0 by %c1_i32_13 dim 0 : vector<32x32xf32>, i32 -> vector<32x32xf32>
    %cst = arith.constant 0.000000e+00 : f32
    %37 = vector.shape_cast %30 : vector<32x1xi1> to vector<32x1xi1>
    %38 = vector.broadcast %37 : vector<32x1xi1> to vector<32x32xi1>
    %39 = vector.broadcast %cst : f32 to vector<32x32xf32>
    %40 = arith.select %38, %36, %39 : vector<32x32xi1>, vector<32x32xf32>
    %c31_i32 = arith.constant 31 : i32
    %41 = tpu.dynamic_rotate %0 by %c31_i32 dim 0 : vector<32x32xf32>, i32 -> vector<32x32xf32>
    %cst_14 = arith.constant 0.000000e+00 : f32
    %42 = vector.shape_cast %32 : vector<32x1xi1> to vector<32x1xi1>
    %43 = vector.broadcast %42 : vector<32x1xi1> to vector<32x32xi1>
    %44 = vector.broadcast %cst_14 : f32 to vector<32x32xf32>
    %45 = arith.select %43, %41, %44 : vector<32x32xi1>, vector<32x32xf32>
    %cst_15 = arith.constant dense<0.000000e+00> : vector<32x64xf32>
    %46 = tpu.matmul %40, %33, %cst_15 {dimension_numbers = #tpu.dot_dimension_numbers<[1], [0], [0], [1], [0, 0, 1, 1], [], []>} : vector<32x32xf32>, vector<32x64xf32>, vector<32x64xf32> -> vector<32x64xf32>
    %cst_16 = arith.constant dense<0.000000e+00> : vector<32x64xf32>
    %47 = tpu.matmul %0, %34, %cst_16 {dimension_numbers = #tpu.dot_dimension_numbers<[1], [0], [0], [1], [0, 0, 1, 1], [], []>} : vector<32x32xf32>, vector<32x64xf32>, vector<32x64xf32> -> vector<32x64xf32>
    %48 = arith.addf %46, %47 : vector<32x64xf32>
    %cst_17 = arith.constant dense<0.000000e+00> : vector<32x64xf32>
    %49 = tpu.matmul %45, %35, %cst_17 {dimension_numbers = #tpu.dot_dimension_numbers<[1], [0], [0], [1], [0, 0, 1, 1], [], []>} : vector<32x32xf32>, vector<32x64xf32>, vector<32x64xf32> -> vector<32x64xf32>
    %50 = arith.addf %48, %49 : vector<32x64xf32>
    %51 = vector.broadcast %3 : vector<1x64xf32> to vector<32x64xf32>
    %52 = arith.addf %50, %51 : vector<32x64xf32>
    %cst_18 = arith.constant 0.000000e+00 : f32
    %53 = vector.broadcast %cst_18 : f32 to vector<32x64xf32>
    %54 = arith.maximumf %52, %53 : vector<32x64xf32>
    %cst_19 = arith.constant dense<0.000000e+00> : vector<32xf32>
    %55 = vector.multi_reduction <add>, %54, %cst_19 [1] : vector<32x64xf32> to vector<32xf32>
    %56 = vector.shape_cast %55 : vector<32xf32> to vector<32x1xf32>
    %cst_20 = arith.constant 6.400000e+01 : f32
    %57 = vector.broadcast %cst_20 : f32 to vector<32x1xf32>
    %58 = arith.divf %56, %57 : vector<32x1xf32>
    %59 = vector.broadcast %58 : vector<32x1xf32> to vector<32x64xf32>
    %60 = arith.subf %54, %59 : vector<32x64xf32>
    %61 = arith.mulf %60, %60 : vector<32x64xf32>
    %cst_21 = arith.constant dense<0.000000e+00> : vector<32xf32>
    %62 = vector.multi_reduction <add>, %61, %cst_21 [1] : vector<32x64xf32> to vector<32xf32>
    %63 = vector.shape_cast %62 : vector<32xf32> to vector<32x1xf32>
    %cst_22 = arith.constant 6.400000e+01 : f32
    %64 = vector.broadcast %cst_22 : f32 to vector<32x1xf32>
    %65 = arith.divf %63, %64 : vector<32x1xf32>
    %cst_23 = arith.constant 9.99999996E-13 : f32
    %66 = vector.broadcast %cst_23 : f32 to vector<32x1xf32>
    %67 = arith.addf %65, %66 : vector<32x1xf32>
    %68 = math.rsqrt %67 : vector<32x1xf32>
    %69 = vector.broadcast %68 : vector<32x1xf32> to vector<32x64xf32>
    %70 = arith.mulf %60, %69 : vector<32x64xf32>
    %71 = vector.broadcast %4 : vector<1x64xf32> to vector<32x64xf32>
    %72 = arith.mulf %70, %71 : vector<32x64xf32>
    %73 = vector.broadcast %5 : vector<1x64xf32> to vector<32x64xf32>
    %74 = arith.addf %72, %73 : vector<32x64xf32>
    %75 = arith.mulf %74, %11 : vector<32x64xf32>
    %c96 = arith.constant 96 : index
    %c0_24 = arith.constant 0 : index
    %76 = vector.load %arg2[%c96, %c0_24] : memref<352x64xf32, #tpu.memory_space<vmem>>, vector<64x64xf32>
    %c160 = arith.constant 160 : index
    %c0_25 = arith.constant 0 : index
    %77 = vector.load %arg2[%c160, %c0_25] : memref<352x64xf32, #tpu.memory_space<vmem>>, vector<64x64xf32>
    %c224 = arith.constant 224 : index
    %c0_26 = arith.constant 0 : index
    %78 = vector.load %arg2[%c224, %c0_26] : memref<352x64xf32, #tpu.memory_space<vmem>>, vector<64x64xf32>
    %c1_i32_27 = arith.constant 1 : i32
    %79 = tpu.dynamic_rotate %75 by %c1_i32_27 dim 0 : vector<32x64xf32>, i32 -> vector<32x64xf32>
    %cst_28 = arith.constant 0.000000e+00 : f32
    %80 = vector.shape_cast %30 : vector<32x1xi1> to vector<32x1xi1>
    %81 = vector.broadcast %80 : vector<32x1xi1> to vector<32x64xi1>
    %82 = vector.broadcast %cst_28 : f32 to vector<32x64xf32>
    %83 = arith.select %81, %79, %82 : vector<32x64xi1>, vector<32x64xf32>
    %c31_i32_29 = arith.constant 31 : i32
    %84 = tpu.dynamic_rotate %75 by %c31_i32_29 dim 0 : vector<32x64xf32>, i32 -> vector<32x64xf32>
    %cst_30 = arith.constant 0.000000e+00 : f32
    %85 = vector.shape_cast %32 : vector<32x1xi1> to vector<32x1xi1>
    %86 = vector.broadcast %85 : vector<32x1xi1> to vector<32x64xi1>
    %87 = vector.broadcast %cst_30 : f32 to vector<32x64xf32>
    %88 = arith.select %86, %84, %87 : vector<32x64xi1>, vector<32x64xf32>
    %cst_31 = arith.constant dense<0.000000e+00> : vector<32x64xf32>
    %89 = tpu.matmul %83, %76, %cst_31 {dimension_numbers = #tpu.dot_dimension_numbers<[1], [0], [0], [1], [0, 0, 1, 1], [], []>} : vector<32x64xf32>, vector<64x64xf32>, vector<32x64xf32> -> vector<32x64xf32>
    %cst_32 = arith.constant dense<0.000000e+00> : vector<32x64xf32>
    %90 = tpu.matmul %75, %77, %cst_32 {dimension_numbers = #tpu.dot_dimension_numbers<[1], [0], [0], [1], [0, 0, 1, 1], [], []>} : vector<32x64xf32>, vector<64x64xf32>, vector<32x64xf32> -> vector<32x64xf32>
    %91 = arith.addf %89, %90 : vector<32x64xf32>
    %cst_33 = arith.constant dense<0.000000e+00> : vector<32x64xf32>
    %92 = tpu.matmul %88, %78, %cst_33 {dimension_numbers = #tpu.dot_dimension_numbers<[1], [0], [0], [1], [0, 0, 1, 1], [], []>} : vector<32x64xf32>, vector<64x64xf32>, vector<32x64xf32> -> vector<32x64xf32>
    %93 = arith.addf %91, %92 : vector<32x64xf32>
    %94 = vector.broadcast %6 : vector<1x64xf32> to vector<32x64xf32>
    %95 = arith.addf %93, %94 : vector<32x64xf32>
    %cst_34 = arith.constant 0.000000e+00 : f32
    %96 = vector.broadcast %cst_34 : f32 to vector<32x64xf32>
    %97 = arith.maximumf %95, %96 : vector<32x64xf32>
    %cst_35 = arith.constant dense<0.000000e+00> : vector<32xf32>
    %98 = vector.multi_reduction <add>, %97, %cst_35 [1] : vector<32x64xf32> to vector<32xf32>
    %99 = vector.shape_cast %98 : vector<32xf32> to vector<32x1xf32>
    %cst_36 = arith.constant 6.400000e+01 : f32
    %100 = vector.broadcast %cst_36 : f32 to vector<32x1xf32>
    %101 = arith.divf %99, %100 : vector<32x1xf32>
    %102 = vector.broadcast %101 : vector<32x1xf32> to vector<32x64xf32>
    %103 = arith.subf %97, %102 : vector<32x64xf32>
    %104 = arith.mulf %103, %103 : vector<32x64xf32>
    %cst_37 = arith.constant dense<0.000000e+00> : vector<32xf32>
    %105 = vector.multi_reduction <add>, %104, %cst_37 [1] : vector<32x64xf32> to vector<32xf32>
    %106 = vector.shape_cast %105 : vector<32xf32> to vector<32x1xf32>
    %cst_38 = arith.constant 6.400000e+01 : f32
    %107 = vector.broadcast %cst_38 : f32 to vector<32x1xf32>
    %108 = arith.divf %106, %107 : vector<32x1xf32>
    %cst_39 = arith.constant 9.99999996E-13 : f32
    %109 = vector.broadcast %cst_39 : f32 to vector<32x1xf32>
    %110 = arith.addf %108, %109 : vector<32x1xf32>
    %111 = math.rsqrt %110 : vector<32x1xf32>
    %112 = vector.broadcast %111 : vector<32x1xf32> to vector<32x64xf32>
    %113 = arith.mulf %103, %112 : vector<32x64xf32>
    %114 = vector.broadcast %7 : vector<1x64xf32> to vector<32x64xf32>
    %115 = arith.mulf %113, %114 : vector<32x64xf32>
    %116 = vector.broadcast %8 : vector<1x64xf32> to vector<32x64xf32>
    %117 = arith.addf %115, %116 : vector<32x64xf32>
    %118 = arith.mulf %117, %11 : vector<32x64xf32>
    %c288 = arith.constant 288 : index
    %c0_40 = arith.constant 0 : index
    %119 = vector.load %arg2[%c288, %c0_40] : memref<352x64xf32, #tpu.memory_space<vmem>>, vector<64x64xf32>
    %cst_41 = arith.constant dense<0.000000e+00> : vector<32x64xf32>
    %120 = tpu.matmul %118, %119, %cst_41 {dimension_numbers = #tpu.dot_dimension_numbers<[1], [0], [0], [1], [0, 0, 1, 1], [], []>} : vector<32x64xf32>, vector<64x64xf32>, vector<32x64xf32> -> vector<32x64xf32>
    %121 = vector.broadcast %9 : vector<1x64xf32> to vector<32x64xf32>
    %122 = arith.addf %120, %121 : vector<32x64xf32>
    %123 = vector.extract_strided_slice %122 {offsets = [0, 0], sizes = [32, 2], strides = [1, 1]} : vector<32x64xf32> to vector<32x2xf32>
    %124 = vector.broadcast %1 : vector<32x1xf32> to vector<32x2xf32>
    %125 = arith.mulf %123, %124 : vector<32x2xf32>
    %c0_42 = arith.constant 0 : index
    %c0_43 = arith.constant 0 : index
    %126 = vector.load %arg4[%c0_42, %c0_43] : memref<32x2xf32, #tpu.memory_space<vmem>>, vector<32x2xf32>
    tpu.vector_store %arg4[%c0_42, %c0_43], %125 {strides = array<i32>} : memref<32x2xf32, #tpu.memory_space<vmem>>, vector<32x2xf32>,
    return
  }
}

</mosaic_0001>

<llo_original>
// kernel: tpu_custom_call.1
$region0: #{tpu_custom_call.1}
  #allocation0 [shape = 'u32[]', space=smem, size = 0x4, offset = 0x4, fixed_abs, tag = 'smem constant byte address 0x4 - core index']
  #allocation1 [shape = 'u32[72,128]{1,0:T(1,128)}', space=vmem, size = 0x9000, scoped, tag = 'internal scratch']
  %s0 = inlined_call_operand.vmem [shape: f32[32,32], index: 0, kind: input, shape index: {}]
  %s1 = inlined_call_operand.vmem [shape: f32[32,1], index: 1, kind: input, shape index: {}]
  %s2 = inlined_call_operand.vmem [shape: f32[352,64], index: 2, kind: input, shape index: {}]
  %s3 = inlined_call_operand.vmem [shape: f32[8,64], index: 3, kind: input, shape index: {}]
  %s4 = inlined_call_operand.vmem [shape: f32[32,2], index: 4, kind: output, shape index: {}]
  %s5 = sld [smem:[#allocation0]]
  $region26: #{tpu_custom_call.1} parent=0
    _
  %s7 = ssub.s32 1, %s5
  %s8 = scalar_select 0, %s7, %s5
  // Predicated region
  $region2: #{tpu_custom_call.1} parent=0 // pred_check
    _
  $region3: #{tpu_custom_call.1} parent=0 // pred_check_branch
    %10 = sbr.rel (0) target = $region5
  $region4: #{tpu_custom_call.1} parent=0 // pred_region
    _
  $region5: #{tpu_custom_call.1} parent=0 // pred_fallthru
    _
  // Predicated region
  $region6: #{tpu_custom_call.1} parent=0 // pred_check
    _
  $region7: #{tpu_custom_call.1} parent=0 // pred_check_branch
    %12 = sbr.rel (0) target = $region9
  $region8: #{tpu_custom_call.1} parent=0 // pred_region
    _
  $region9: #{tpu_custom_call.1} parent=0 // pred_fallthru
    _
  // Predicated region
  $region10: #{tpu_custom_call.1} parent=0 // pred_check
    _
  $region11: #{tpu_custom_call.1} parent=0 // pred_check_branch
    %14 = sbr.rel (0) target = $region13
  $region12: #{tpu_custom_call.1} parent=0 // pred_region
    _
  $region13: #{tpu_custom_call.1} parent=0 // pred_fallthru
    _
  // Predicated region
  $region14: #{tpu_custom_call.1} parent=0 // pred_check
    _
  $region15: #{tpu_custom_call.1} parent=0 // pred_check_branch
    %16 = sbr.rel (0) target = $region17
  $region16: #{tpu_custom_call.1} parent=0 // pred_region
    _
  $region17: #{tpu_custom_call.1} parent=0 // pred_fallthru
    _
  %v17 = vld [vmem:[%s0] sm:$0xff]
  %v18 = vld [vmem:[%s0 + $0x8] sm:$0xff]
  %v19 = vld [vmem:[%s0 + $0x10] sm:$0xff]
  %v20 = vld [vmem:[%s0 + $0x18] sm:$0xff]
  %v21 = vld [vmem:[%s1] sm:$0xff]
  %v22 = vld [vmem:[%s1 + $0x8] sm:$0xff]
  %v23 = vld [vmem:[%s1 + $0x10] sm:$0xff]
  %v24 = vld [vmem:[%s1 + $0x18] sm:$0xff]
  %v25 = vld [vmem:[%s3] sm:$0xff]
  %27 = vset.pattern.permute.xlu0 0
  %28 = vperm.xlu0 %27, %v21
  %v29 = vpop.permute.xlu0 %28
  %32 = vset.pattern.permute.xlu0 0
  %33 = vperm.xlu0 %32, %v22
  %v34 = vpop.permute.xlu0 %33
  %37 = vset.pattern.permute.xlu0 0
  %38 = vperm.xlu0 %37, %v23
  %v39 = vpop.permute.xlu0 %38
  %42 = vset.pattern.permute.xlu0 0
  %43 = vperm.xlu0 %42, %v24
  %v44 = vpop.permute.xlu0 %43
  %v46 = vlaneseq
  %v47 = vshrl.u32 %v46, 7
  %v48 = vadd.s32 %v47, 8
  %v49 = vadd.s32 %v47, 16
  %v50 = vadd.s32 %v47, 24
  %vm51 = vcmp.lt.s32.totalorder %v47, 0
  %v52 = vsub.s32 0, %v47
  %v53 = vsel %vm51, %v52, %v47
  %v54 = vshrl.u32 %v53, 4
  %v55 = vand.u32 %v53, 15
  %v56 = vsub.s32 0, %v55
  %v57 = vsel %vm51, %v56, %v55
  %vm58 = vcmp.lt.s32.totalorder %v48, 0
  %v59 = vsub.s32 0, %v48
  %v60 = vsel %vm58, %v59, %v48
  %v61 = vshrl.u32 %v60, 4
  %v62 = vand.u32 %v60, 15
  %v63 = vsub.s32 0, %v62
  %v64 = vsel %vm58, %v63, %v62
  %vm65 = vcmp.lt.s32.totalorder %v49, 0
  %v66 = vsub.s32 0, %v49
  %v67 = vsel %vm65, %v66, %v49
  %v68 = vshrl.u32 %v67, 4
  %v69 = vand.u32 %v67, 15
  %v70 = vsub.s32 0, %v69
  %v71 = vsel %vm65, %v70, %v69
  %vm72 = vcmp.lt.s32.totalorder %v50, 0
  %v73 = vsub.s32 0, %v50
  %v74 = vsel %vm72, %v73, %v50
  %v75 = vshrl.u32 %v74, 4
  %v76 = vand.u32 %v74, 15
  %v77 = vsub.s32 0, %v76
  %v78 = vsel %vm72, %v77, %v76
  %vm79 = vcmp.ne.s32.totalorder %v57, 0
  %vm80 = vcmp.ne.s32.totalorder %v64, 0
  %vm81 = vcmp.ne.s32.totalorder %v71, 0
  %vm82 = vcmp.ne.s32.totalorder %v78, 0
  %vm83 = vcmp.lt.s32.totalorder %v57, 0
  %vm84 = vcmp.lt.s32.totalorder %v64, 0
  %vm85 = vcmp.lt.s32.totalorder %v71, 0
  %vm86 = vcmp.lt.s32.totalorder %v78, 0
  %vm87 = vmand %vm83, %vm79
  %vm88 = vmand %vm84, %vm80
  %vm89 = vmand %vm85, %vm81
  %vm90 = vmand %vm86, %vm82
  %v91 = vadd.s32 %v57, 16
  %v92 = vadd.s32 %v64, 16
  %v93 = vadd.s32 %v71, 16
  %v94 = vadd.s32 %v78, 16
  %v95 = vsel %vm87, %v91, %v57
  %v96 = vsel %vm88, %v92, %v64
  %v97 = vsel %vm89, %v93, %v71
  %v98 = vsel %vm90, %v94, %v78
  %vm99 = vcmp.ne.s32.totalorder %v95, 0
  %vm100 = vcmp.ne.s32.totalorder %v96, 0
  %vm101 = vcmp.ne.s32.totalorder %v97, 0
  %vm102 = vcmp.ne.s32.totalorder %v98, 0
  %vm103 = vcmp.ne.s32.totalorder %v95, 15
  %vm104 = vcmp.ne.s32.totalorder %v96, 15
  %vm105 = vcmp.ne.s32.totalorder %v97, 15
  %vm106 = vcmp.ne.s32.totalorder %v98, 15
  %v107 = vld [vmem:[%s2] sm:$0xff]
  %v108 = vld [vmem:[%s2 + $0x8] sm:$0xff]
  %v109 = vld [vmem:[%s2 + $0x10] sm:$0xff]
  %v110 = vld [vmem:[%s2 + $0x18] sm:$0xff]
  %v111 = vld [vmem:[%s2 + $0x20] sm:$0xff]
  %v112 = vld [vmem:[%s2 + $0x28] sm:$0xff]
  %v113 = vld [vmem:[%s2 + $0x30] sm:$0xff]
  %v114 = vld [vmem:[%s2 + $0x38] sm:$0xff]
  %v115 = vld [vmem:[%s2 + $0x40] sm:$0xff]
  %v116 = vld [vmem:[%s2 + $0x48] sm:$0xff]
  %v117 = vld [vmem:[%s2 + $0x50] sm:$0xff]
  %v118 = vld [vmem:[%s2 + $0x58] sm:$0xff]
  %v119 = vrot.slane %v17, 7
  %v120 = vrot.slane %v18, 7
  %v121 = vrot.slane %v19, 7
  %v122 = vrot.slane %v20, 7
  %vm123 = vcmp.lt.s32.totalorder %v47, 1
  %v124 = vsel %vm123, %v121, %v122
  %v125 = vsel %vm123, %v120, %v121
  %v126 = vsel %vm123, %v119, %v120
  %v127 = vsel %vm123, %v122, %v119
  %v128 = vsel %vm99, 1, 0
  %v129 = vsel %vm100, 1, 0
  %v130 = vsel %vm101, 1, 0
  %v131 = vsel %vm102, 1, 0
  %vm132 = vcmp.eq.s32.totalorder %v128, 1
  %vm133 = vcmp.eq.s32.totalorder %v129, 1
  %vm134 = vcmp.eq.s32.totalorder %v130, 1
  %vm135 = vcmp.eq.s32.totalorder %v131, 1
  %v136 = vsel %vm132, %v127, 0.0
  %v137 = vsel %vm133, %v126, 0.0
  %v138 = vsel %vm134, %v125, 0.0
  %v139 = vsel %vm135, %v124, 0.0
  %v140 = vrot.slane %v17, 1
  %v141 = vrot.slane %v18, 1
  %v142 = vrot.slane %v19, 1
  %v143 = vrot.slane %v20, 1
  %vm144 = vcmp.lt.s32.totalorder %v47, 7
  %v145 = vsel %vm144, %v142, %v143
  %v146 = vsel %vm144, %v141, %v142
  %v147 = vsel %vm144, %v140, %v141
  %v148 = vsel %vm144, %v143, %v140
  %v149 = vsel %vm103, 1, 0
  %v150 = vsel %vm104, 1, 0
  %v151 = vsel %vm105, 1, 0
  %v152 = vsel %vm106, 1, 0
  %vm153 = vcmp.eq.s32.totalorder %v149, 1
  %vm154 = vcmp.eq.s32.totalorder %v150, 1
  %vm155 = vcmp.eq.s32.totalorder %v151, 1
  %vm156 = vcmp.eq.s32.totalorder %v152, 1
  %v157 = vsel %vm153, %v147, 0.0
  %v158 = vsel %vm154, %v146, 0.0
  %v159 = vsel %vm155, %v145, 0.0
  %v160 = vsel %vm156, %v148, 0.0
  %vm161 = vcmask 261120
  %v163 = vsel %vm161, %v17, 0
  %v166 = vsel %vm161, %v18, 0
  %v169 = vsel %vm161, %v19, 0
  %v172 = vsel %vm161, %v20, 0
  %174 = vmatpush.msra.mxu0 0.0
  %175 = vmatpush.msra.mxu0 0.0
  %176 = vmatpush.msra.mxu0 0.0
  %177 = vmatpush.msra.mxu0 0.0
  %178 = vmatpush.msra.mxu0 0.0
  %179 = vmatpush.msra.mxu0 0.0
  %180 = vmatpush.msra.mxu0 0.0
  %181 = vmatpush.msra.mxu0 0.0
  %182 = vmatpush.msra.mxu0 0.0
  %183 = vmatpush.msra.mxu0 0.0
  %184 = vmatpush.msra.mxu0 0.0
  %185 = vmatpush.msra.mxu0 0.0
  %186 = vmatpush.msra.mxu0 %v114
  %187 = vmatpush.msra.mxu0 %v113
  %188 = vmatpush.msra.mxu0 %v112
  %189 = vmatpush.msra.mxu0 %v111
  %190 = vmatmul.f32.gmra.mxu0 %v163
  %v191 = vpop.f32.mrf.mxu0
  %v192 = vadd.f32 0.0, %v191
  %193 = vmatmul.f32.gmra.mxu0 %v166
  %v194 = vpop.f32.mrf.mxu0
  %v195 = vadd.f32 0.0, %v194
  %196 = vmatmul.f32.gmra.mxu0 %v169
  %v197 = vpop.f32.mrf.mxu0
  %v198 = vadd.f32 0.0, %v197
  %199 = vmatmul.f32.gmra.mxu0 %v172
  %v200 = vpop.f32.mrf.mxu0
  %v201 = vadd.f32 0.0, %v200
  %202 = vdwg.mxu0
  %v204 = vsel %vm161, %v136, 0
  %v207 = vsel %vm161, %v137, 0
  %v210 = vsel %vm161, %v138, 0
  %v213 = vsel %vm161, %v139, 0
  %215 = vmatpush.msra.mxu0 0.0
  %216 = vmatpush.msra.mxu0 0.0
  %217 = vmatpush.msra.mxu0 0.0
  %218 = vmatpush.msra.mxu0 0.0
  %219 = vmatpush.msra.mxu0 0.0
  %220 = vmatpush.msra.mxu0 0.0
  %221 = vmatpush.msra.mxu0 0.0
  %222 = vmatpush.msra.mxu0 0.0
  %223 = vmatpush.msra.mxu0 0.0
  %224 = vmatpush.msra.mxu0 0.0
  %225 = vmatpush.msra.mxu0 0.0
  %226 = vmatpush.msra.mxu0 0.0
  %227 = vmatpush.msra.mxu0 %v110
  %228 = vmatpush.msra.mxu0 %v109
  %229 = vmatpush.msra.mxu0 %v108
  %230 = vmatpush.msra.mxu0 %v107
  %231 = vmatmul.f32.gmra.mxu0 %v204
  %v232 = vpop.f32.mrf.mxu0
  %v233 = vadd.f32 %v192, %v232
  %234 = vmatmul.f32.gmra.mxu0 %v207
  %v235 = vpop.f32.mrf.mxu0
  %v236 = vadd.f32 %v195, %v235
  %237 = vmatmul.f32.gmra.mxu0 %v210
  %v238 = vpop.f32.mrf.mxu0
  %v239 = vadd.f32 %v198, %v238
  %240 = vmatmul.f32.gmra.mxu0 %v213
  %v241 = vpop.f32.mrf.mxu0
  %v242 = vadd.f32 %v201, %v241
  %243 = vdwg.mxu0
  %v245 = vsel %vm161, %v157, 0
  %v248 = vsel %vm161, %v158, 0
  %v251 = vsel %vm161, %v159, 0
  %v254 = vsel %vm161, %v160, 0
  %256 = vmatpush.msra.mxu0 0.0
  %257 = vmatpush.msra.mxu0 0.0
  %258 = vmatpush.msra.mxu0 0.0
  %259 = vmatpush.msra.mxu0 0.0
  %260 = vmatpush.msra.mxu0 0.0
  %261 = vmatpush.msra.mxu0 0.0
  %262 = vmatpush.msra.mxu0 0.0
  %263 = vmatpush.msra.mxu0 0.0
  %264 = vmatpush.msra.mxu0 0.0
  %265 = vmatpush.msra.mxu0 0.0
  %266 = vmatpush.msra.mxu0 0.0
  %267 = vmatpush.msra.mxu0 0.0
  %268 = vmatpush.msra.mxu0 %v118
  %269 = vmatpush.msra.mxu0 %v117
  %270 = vmatpush.msra.mxu0 %v116
  %271 = vmatpush.msra.mxu0 %v115
  %272 = vmatmul.f32.gmra.mxu0 %v245
  %v273 = vpop.f32.mrf.mxu0
  %v274 = vadd.f32 0.0, %v273
  %275 = vmatmul.f32.gmra.mxu0 %v248
  %v276 = vpop.f32.mrf.mxu0
  %v277 = vadd.f32 0.0, %v276
  %278 = vmatmul.f32.gmra.mxu0 %v251
  %v279 = vpop.f32.mrf.mxu0
  %v280 = vadd.f32 0.0, %v279
  %281 = vmatmul.f32.gmra.mxu0 %v254
  %v282 = vpop.f32.mrf.mxu0
  %v283 = vadd.f32 0.0, %v282
  %284 = vdwg.mxu0
  %v285 = vadd.f32 %v233, %v274
  %v286 = vadd.f32 %v236, %v277
  %v287 = vadd.f32 %v239, %v280
  %v288 = vadd.f32 %v242, %v283
  %v289 = vperm.slane %v25, 0
  %v290 = vadd.f32 %v285, %v289
  %v291 = vadd.f32 %v286, %v289
  %v292 = vadd.f32 %v287, %v289
  %v293 = vadd.f32 %v288, %v289
  %v294 = vmax.f32 %v290, 0.0
  %v295 = vmax.f32 %v291, 0.0
  %v296 = vmax.f32 %v292, 0.0
  %v297 = vmax.f32 %v293, 0.0
  %vm298 = vcmask 523264
  %v299 = vsel %vm298, %v294, 0.0
  %300 = vadd.xlane.f32.xlu0 %v299
  %v301 = vpop.xlane.xlu0 %300
  %v302 = vsel %vm298, %v295, 0.0
  %303 = vadd.xlane.f32.xlu0 %v302
  %v304 = vpop.xlane.xlu0 %303
  %v305 = vsel %vm298, %v296, 0.0
  %306 = vadd.xlane.f32.xlu0 %v305
  %v307 = vpop.xlane.xlu0 %306
  %v308 = vsel %vm298, %v297, 0.0
  %309 = vadd.xlane.f32.xlu0 %v308
  %v310 = vpop.xlane.xlu0 %309
  %v311 = vrcp.pop 64.0
  %v312 = vmul.f32 64.0, %v311
  %v313 = vsub.f32 1.0, %v312
  %v314 = vmul.f32 %v311, %v313
  %v315 = vadd.f32 %v311, %v314
  %vm316 = vweird.f32 %v311
  %v317 = vsel %vm316, %v311, %v315
  %v318 = vmul.f32 %v301, %v317
  %v319 = vmul.f32 %v304, %v317
  %v320 = vmul.f32 %v307, %v317
  %v321 = vmul.f32 %v310, %v317
  %v322 = vsub.f32 %v294, %v318
  %v323 = vsub.f32 %v295, %v319
  %v324 = vsub.f32 %v296, %v320
  %v325 = vsub.f32 %v297, %v321
  %v326 = vmul.f32 %v322, %v322
  %v327 = vmul.f32 %v323, %v323
  %v328 = vmul.f32 %v324, %v324
  %v329 = vmul.f32 %v325, %v325
  %v330 = vsel %vm298, %v326, 0.0
  %331 = vadd.xlane.f32.xlu0 %v330
  %v332 = vpop.xlane.xlu0 %331
  %v333 = vsel %vm298, %v327, 0.0
  %334 = vadd.xlane.f32.xlu0 %v333
  %v335 = vpop.xlane.xlu0 %334
  %v336 = vsel %vm298, %v328, 0.0
  %337 = vadd.xlane.f32.xlu0 %v336
  %v338 = vpop.xlane.xlu0 %337
  %v339 = vsel %vm298, %v329, 0.0
  %340 = vadd.xlane.f32.xlu0 %v339
  %v341 = vpop.xlane.xlu0 %340
  %v342 = vmul.f32 %v332, %v317
  %v343 = vmul.f32 %v335, %v317
  %v344 = vmul.f32 %v338, %v317
  %v345 = vmul.f32 %v341, %v317
  %v346 = vadd.f32 %v342, 1e-12
  %v347 = vadd.f32 %v343, 1e-12
  %v348 = vadd.f32 %v344, 1e-12
  %v349 = vadd.f32 %v345, 1e-12
  %v350 = vrsqrt.pop %v346
  %v351 = vmul.f32 %v350, %v346
  %v352 = vmul.f32 %v351, %v350
  %v353 = vmul.f32 0.5, %v352
  %v354 = vsub.f32 1.5, %v353
  %v355 = vmul.f32 %v350, %v354
  %vm356 = vweird.f32 %v346
  %vm357 = vweird.f32 %v350
  %vm358 = vmor %vm356, %vm357
  %v359 = vsel %vm358, %v350, %v355
  %v360 = vrsqrt.pop %v347
  %v361 = vmul.f32 %v360, %v347
  %v362 = vmul.f32 %v361, %v360
  %v363 = vmul.f32 0.5, %v362
  %v364 = vsub.f32 1.5, %v363
  %v365 = vmul.f32 %v360, %v364
  %vm366 = vweird.f32 %v347
  %vm367 = vweird.f32 %v360
  %vm368 = vmor %vm366, %vm367
  %v369 = vsel %vm368, %v360, %v365
  %v370 = vrsqrt.pop %v348
  %v371 = vmul.f32 %v370, %v348
  %v372 = vmul.f32 %v371, %v370
  %v373 = vmul.f32 0.5, %v372
  %v374 = vsub.f32 1.5, %v373
  %v375 = vmul.f32 %v370, %v374
  %vm376 = vweird.f32 %v348
  %vm377 = vweird.f32 %v370
  %vm378 = vmor %vm376, %vm377
  %v379 = vsel %vm378, %v370, %v375
  %v380 = vrsqrt.pop %v349
  %v381 = vmul.f32 %v380, %v349
  %v382 = vmul.f32 %v381, %v380
  %v383 = vmul.f32 0.5, %v382
  %v384 = vsub.f32 1.5, %v383
  %v385 = vmul.f32 %v380, %v384
  %vm386 = vweird.f32 %v349
  %vm387 = vweird.f32 %v380
  %vm388 = vmor %vm386, %vm387
  %v389 = vsel %vm388, %v380, %v385
  %v390 = vmul.f32 %v322, %v359
  %v391 = vmul.f32 %v323, %v369
  %v392 = vmul.f32 %v324, %v379
  %v393 = vmul.f32 %v325, %v389
  %v394 = vperm.slane %v25, 1
  %v395 = vmul.f32 %v390, %v394
  %v396 = vmul.f32 %v391, %v394
  %v397 = vmul.f32 %v392, %v394
  %v398 = vmul.f32 %v393, %v394
  %v399 = vperm.slane %v25, 2
  %v400 = vadd.f32 %v395, %v399
  %v401 = vadd.f32 %v396, %v399
  %v402 = vadd.f32 %v397, %v399
  %v403 = vadd.f32 %v398, %v399
  %v404 = vmul.f32 %v400, %v29
  %v405 = vmul.f32 %v401, %v34
  %v406 = vmul.f32 %v402, %v39
  %v407 = vmul.f32 %v403, %v44
  %v408 = vld [vmem:[%s2 + $0x60] sm:$0xff]
  %v409 = vld [vmem:[%s2 + $0x68] sm:$0xff]
  %v410 = vld [vmem:[%s2 + $0x70] sm:$0xff]
  %v411 = vld [vmem:[%s2 + $0x78] sm:$0xff]
  %v412 = vld [vmem:[%s2 + $0x80] sm:$0xff]
  %v413 = vld [vmem:[%s2 + $0x88] sm:$0xff]
  %v414 = vld [vmem:[%s2 + $0x90] sm:$0xff]
  %v415 = vld [vmem:[%s2 + $0x98] sm:$0xff]
  %v416 = vld [vmem:[%s2 + $0xa0] sm:$0xff]
  %v417 = vld [vmem:[%s2 + $0xa8] sm:$0xff]
  %v418 = vld [vmem:[%s2 + $0xb0] sm:$0xff]
  %v419 = vld [vmem:[%s2 + $0xb8] sm:$0xff]
  %v420 = vld [vmem:[%s2 + $0xc0] sm:$0xff]
  %v421 = vld [vmem:[%s2 + $0xc8] sm:$0xff]
  %v422 = vld [vmem:[%s2 + $0xd0] sm:$0xff]
  %v423 = vld [vmem:[%s2 + $0xd8] sm:$0xff]
  %v424 = vld [vmem:[%s2 + $0xe0] sm:$0xff]
  %v425 = vld [vmem:[%s2 + $0xe8] sm:$0xff]
  %v426 = vld [vmem:[%s2 + $0xf0] sm:$0xff]
  %v427 = vld [vmem:[%s2 + $0xf8] sm:$0xff]
  %v428 = vld [vmem:[%s2 + $0x100] sm:$0xff]
  %v429 = vld [vmem:[%s2 + $0x108] sm:$0xff]
  %v430 = vld [vmem:[%s2 + $0x110] sm:$0xff]
  %v431 = vld [vmem:[%s2 + $0x118] sm:$0xff]
  %v432 = vrot.slane %v404, 7
  %v433 = vrot.slane %v405, 7
  %v434 = vrot.slane %v406, 7
  %v435 = vrot.slane %v407, 7
  %v436 = vsel %vm123, %v434, %v435
  %v437 = vsel %vm123, %v433, %v434
  %v438 = vsel %vm123, %v432, %v433
  %v439 = vsel %vm123, %v435, %v432
  %v440 = vsel %vm132, %v439, 0.0
  %v441 = vsel %vm133, %v438, 0.0
  %v442 = vsel %vm134, %v437, 0.0
  %v443 = vsel %vm135, %v436, 0.0
  %v444 = vrot.slane %v404, 1
  %v445 = vrot.slane %v405, 1
  %v446 = vrot.slane %v406, 1
  %v447 = vrot.slane %v407, 1
  %v448 = vsel %vm144, %v446, %v447
  %v449 = vsel %vm144, %v445, %v446
  %v450 = vsel %vm144, %v444, %v445
  %v451 = vsel %vm144, %v447, %v444
  %v452 = vsel %vm153, %v450, 0.0
  %v453 = vsel %vm154, %v449, 0.0
  %v454 = vsel %vm155, %v448, 0.0
  %v455 = vsel %vm156, %v451, 0.0
  %v457 = vsel %vm298, %v404, 0
  %v460 = vsel %vm298, %v405, 0
  %v463 = vsel %vm298, %v406, 0
  %v466 = vsel %vm298, %v407, 0
  %468 = vmatpush.msra.mxu0 0.0
  %469 = vmatpush.msra.mxu0 0.0
  %470 = vmatpush.msra.mxu0 0.0
  %471 = vmatpush.msra.mxu0 0.0
  %472 = vmatpush.msra.mxu0 0.0
  %473 = vmatpush.msra.mxu0 0.0
  %474 = vmatpush.msra.mxu0 0.0
  %475 = vmatpush.msra.mxu0 0.0
  %476 = vmatpush.msra.mxu0 %v423
  %477 = vmatpush.msra.mxu0 %v422
  %478 = vmatpush.msra.mxu0 %v421
  %479 = vmatpush.msra.mxu0 %v420
  %480 = vmatpush.msra.mxu0 %v419
  %481 = vmatpush.msra.mxu0 %v418
  %482 = vmatpush.msra.mxu0 %v417
  %483 = vmatpush.msra.mxu0 %v416
  %484 = vmatmul.f32.gmra.mxu0 %v457
  %v485 = vpop.f32.mrf.mxu0
  %v486 = vadd.f32 0.0, %v485
  %487 = vmatmul.f32.gmra.mxu0 %v460
  %v488 = vpop.f32.mrf.mxu0
  %v489 = vadd.f32 0.0, %v488
  %490 = vmatmul.f32.gmra.mxu0 %v463
  %v491 = vpop.f32.mrf.mxu0
  %v492 = vadd.f32 0.0, %v491
  %493 = vmatmul.f32.gmra.mxu0 %v466
  %v494 = vpop.f32.mrf.mxu0
  %v495 = vadd.f32 0.0, %v494
  %496 = vdwg.mxu0
  %v498 = vsel %vm298, %v440, 0
  %v501 = vsel %vm298, %v441, 0
  %v504 = vsel %vm298, %v442, 0
  %v507 = vsel %vm298, %v443, 0
  %509 = vmatpush.msra.mxu0 0.0
  %510 = vmatpush.msra.mxu0 0.0
  %511 = vmatpush.msra.mxu0 0.0
  %512 = vmatpush.msra.mxu0 0.0
  %513 = vmatpush.msra.mxu0 0.0
  %514 = vmatpush.msra.mxu0 0.0
  %515 = vmatpush.msra.mxu0 0.0
  %516 = vmatpush.msra.mxu0 0.0
  %517 = vmatpush.msra.mxu0 %v415
  %518 = vmatpush.msra.mxu0 %v414
  %519 = vmatpush.msra.mxu0 %v413
  %520 = vmatpush.msra.mxu0 %v412
  %521 = vmatpush.msra.mxu0 %v411
  %522 = vmatpush.msra.mxu0 %v410
  %523 = vmatpush.msra.mxu0 %v409
  %524 = vmatpush.msra.mxu0 %v408
  %525 = vmatmul.f32.gmra.mxu0 %v498
  %v526 = vpop.f32.mrf.mxu0
  %v527 = vadd.f32 %v486, %v526
  %528 = vmatmul.f32.gmra.mxu0 %v501
  %v529 = vpop.f32.mrf.mxu0
  %v530 = vadd.f32 %v489, %v529
  %531 = vmatmul.f32.gmra.mxu0 %v504
  %v532 = vpop.f32.mrf.mxu0
  %v533 = vadd.f32 %v492, %v532
  %534 = vmatmul.f32.gmra.mxu0 %v507
  %v535 = vpop.f32.mrf.mxu0
  %v536 = vadd.f32 %v495, %v535
  %537 = vdwg.mxu0
  %v539 = vsel %vm298, %v452, 0
  %v542 = vsel %vm298, %v453, 0
  %v545 = vsel %vm298, %v454, 0
  %v548 = vsel %vm298, %v455, 0
  %550 = vmatpush.msra.mxu0 0.0
  %551 = vmatpush.msra.mxu0 0.0
  %552 = vmatpush.msra.mxu0 0.0
  %553 = vmatpush.msra.mxu0 0.0
  %554 = vmatpush.msra.mxu0 0.0
  %555 = vmatpush.msra.mxu0 0.0
  %556 = vmatpush.msra.mxu0 0.0
  %557 = vmatpush.msra.mxu0 0.0
  %558 = vmatpush.msra.mxu0 %v431
  %559 = vmatpush.msra.mxu0 %v430
  %560 = vmatpush.msra.mxu0 %v429
  %561 = vmatpush.msra.mxu0 %v428
  %562 = vmatpush.msra.mxu0 %v427
  %563 = vmatpush.msra.mxu0 %v426
  %564 = vmatpush.msra.mxu0 %v425
  %565 = vmatpush.msra.mxu0 %v424
  %566 = vmatmul.f32.gmra.mxu0 %v539
  %v567 = vpop.f32.mrf.mxu0
  %v568 = vadd.f32 0.0, %v567
  %569 = vmatmul.f32.gmra.mxu0 %v542
  %v570 = vpop.f32.mrf.mxu0
  %v571 = vadd.f32 0.0, %v570
  %572 = vmatmul.f32.gmra.mxu0 %v545
  %v573 = vpop.f32.mrf.mxu0
  %v574 = vadd.f32 0.0, %v573
  %575 = vmatmul.f32.gmra.mxu0 %v548
  %v576 = vpop.f32.mrf.mxu0
  %v577 = vadd.f32 0.0, %v576
  %578 = vdwg.mxu0
  %v579 = vadd.f32 %v527, %v568
  %v580 = vadd.f32 %v530, %v571
  %v581 = vadd.f32 %v533, %v574
  %v582 = vadd.f32 %v536, %v577
  %v583 = vperm.slane %v25, 3
  %v584 = vadd.f32 %v579, %v583
  %v585 = vadd.f32 %v580, %v583
  %v586 = vadd.f32 %v581, %v583
  %v587 = vadd.f32 %v582, %v583
  %v588 = vmax.f32 %v584, 0.0
  %v589 = vmax.f32 %v585, 0.0
  %v590 = vmax.f32 %v586, 0.0
  %v591 = vmax.f32 %v587, 0.0
  %v592 = vsel %vm298, %v588, 0.0
  %593 = vadd.xlane.f32.xlu0 %v592
  %v594 = vpop.xlane.xlu0 %593
  %v595 = vsel %vm298, %v589, 0.0
  %596 = vadd.xlane.f32.xlu0 %v595
  %v597 = vpop.xlane.xlu0 %596
  %v598 = vsel %vm298, %v590, 0.0
  %599 = vadd.xlane.f32.xlu0 %v598
  %v600 = vpop.xlane.xlu0 %599
  %v601 = vsel %vm298, %v591, 0.0
  %602 = vadd.xlane.f32.xlu0 %v601
  %v603 = vpop.xlane.xlu0 %602
  %v604 = vmul.f32 %v594, %v317
  %v605 = vmul.f32 %v597, %v317
  %v606 = vmul.f32 %v600, %v317
  %v607 = vmul.f32 %v603, %v317
  %v608 = vsub.f32 %v588, %v604
  %v609 = vsub.f32 %v589, %v605
  %v610 = vsub.f32 %v590, %v606
  %v611 = vsub.f32 %v591, %v607
  %v612 = vmul.f32 %v608, %v608
  %v613 = vmul.f32 %v609, %v609
  %v614 = vmul.f32 %v610, %v610
  %v615 = vmul.f32 %v611, %v611
  %v616 = vsel %vm298, %v612, 0.0
  %617 = vadd.xlane.f32.xlu0 %v616
  %v618 = vpop.xlane.xlu0 %617
  %v619 = vsel %vm298, %v613, 0.0
  %620 = vadd.xlane.f32.xlu0 %v619
  %v621 = vpop.xlane.xlu0 %620
  %v622 = vsel %vm298, %v614, 0.0
  %623 = vadd.xlane.f32.xlu0 %v622
  %v624 = vpop.xlane.xlu0 %623
  %v625 = vsel %vm298, %v615, 0.0
  %626 = vadd.xlane.f32.xlu0 %v625
  %v627 = vpop.xlane.xlu0 %626
  %v628 = vmul.f32 %v618, %v317
  %v629 = vmul.f32 %v621, %v317
  %v630 = vmul.f32 %v624, %v317
  %v631 = vmul.f32 %v627, %v317
  %v632 = vadd.f32 %v628, 1e-12
  %v633 = vadd.f32 %v629, 1e-12
  %v634 = vadd.f32 %v630, 1e-12
  %v635 = vadd.f32 %v631, 1e-12
  %v636 = vrsqrt.pop %v632
  %v637 = vmul.f32 %v636, %v632
  %v638 = vmul.f32 %v637, %v636
  %v639 = vmul.f32 0.5, %v638
  %v640 = vsub.f32 1.5, %v639
  %v641 = vmul.f32 %v636, %v640
  %vm642 = vweird.f32 %v632
  %vm643 = vweird.f32 %v636
  %vm644 = vmor %vm642, %vm643
  %v645 = vsel %vm644, %v636, %v641
  %v646 = vrsqrt.pop %v633
  %v647 = vmul.f32 %v646, %v633
  %v648 = vmul.f32 %v647, %v646
  %v649 = vmul.f32 0.5, %v648
  %v650 = vsub.f32 1.5, %v649
  %v651 = vmul.f32 %v646, %v650
  %vm652 = vweird.f32 %v633
  %vm653 = vweird.f32 %v646
  %vm654 = vmor %vm652, %vm653
  %v655 = vsel %vm654, %v646, %v651
  %v656 = vrsqrt.pop %v634
  %v657 = vmul.f32 %v656, %v634
  %v658 = vmul.f32 %v657, %v656
  %v659 = vmul.f32 0.5, %v658
  %v660 = vsub.f32 1.5, %v659
  %v661 = vmul.f32 %v656, %v660
  %vm662 = vweird.f32 %v634
  %vm663 = vweird.f32 %v656
  %vm664 = vmor %vm662, %vm663
  %v665 = vsel %vm664, %v656, %v661
  %v666 = vrsqrt.pop %v635
  %v667 = vmul.f32 %v666, %v635
  %v668 = vmul.f32 %v667, %v666
  %v669 = vmul.f32 0.5, %v668
  %v670 = vsub.f32 1.5, %v669
  %v671 = vmul.f32 %v666, %v670
  %vm672 = vweird.f32 %v635
  %vm673 = vweird.f32 %v666
  %vm674 = vmor %vm672, %vm673
  %v675 = vsel %vm674, %v666, %v671
  %v676 = vmul.f32 %v608, %v645
  %v677 = vmul.f32 %v609, %v655
  %v678 = vmul.f32 %v610, %v665
  %v679 = vmul.f32 %v611, %v675
  %v680 = vperm.slane %v25, 4
  %v681 = vmul.f32 %v676, %v680
  %v682 = vmul.f32 %v677, %v680
  %v683 = vmul.f32 %v678, %v680
  %v684 = vmul.f32 %v679, %v680
  %v685 = vperm.slane %v25, 5
  %v686 = vadd.f32 %v681, %v685
  %v687 = vadd.f32 %v682, %v685
  %v688 = vadd.f32 %v683, %v685
  %v689 = vadd.f32 %v684, %v685
  %v690 = vmul.f32 %v686, %v29
  %v691 = vmul.f32 %v687, %v34
  %v692 = vmul.f32 %v688, %v39
  %v693 = vmul.f32 %v689, %v44
  %v694 = vld [vmem:[%s2 + $0x120] sm:$0xff]
  %v695 = vld [vmem:[%s2 + $0x128] sm:$0xff]
  %v696 = vld [vmem:[%s2 + $0x130] sm:$0xff]
  %v697 = vld [vmem:[%s2 + $0x138] sm:$0xff]
  %v698 = vld [vmem:[%s2 + $0x140] sm:$0xff]
  %v699 = vld [vmem:[%s2 + $0x148] sm:$0xff]
  %v700 = vld [vmem:[%s2 + $0x150] sm:$0xff]
  %v701 = vld [vmem:[%s2 + $0x158] sm:$0xff]
  %v702 = vperm.slane %v25, 6
  %v704 = vsel %vm298, %v690, 0
  %v707 = vsel %vm298, %v691, 0
  %v710 = vsel %vm298, %v692, 0
  %v713 = vsel %vm298, %v693, 0
  %715 = vmatpush.msra.mxu0 0.0
  %716 = vmatpush.msra.mxu0 0.0
  %717 = vmatpush.msra.mxu0 0.0
  %718 = vmatpush.msra.mxu0 0.0
  %719 = vmatpush.msra.mxu0 0.0
  %720 = vmatpush.msra.mxu0 0.0
  %721 = vmatpush.msra.mxu0 0.0
  %722 = vmatpush.msra.mxu0 0.0
  %723 = vmatpush.msra.mxu0 %v701
  %724 = vmatpush.msra.mxu0 %v700
  %725 = vmatpush.msra.mxu0 %v699
  %726 = vmatpush.msra.mxu0 %v698
  %727 = vmatpush.msra.mxu0 %v697
  %728 = vmatpush.msra.mxu0 %v696
  %729 = vmatpush.msra.mxu0 %v695
  %730 = vmatpush.msra.mxu0 %v694
  %731 = vmatmul.f32.gmra.mxu0 %v704
  %v732 = vpop.f32.mrf.mxu0
  %v733 = vadd.f32 %v702, %v732
  %734 = vmatmul.f32.gmra.mxu0 %v707
  %v735 = vpop.f32.mrf.mxu0
  %v736 = vadd.f32 %v702, %v735
  %737 = vmatmul.f32.gmra.mxu0 %v710
  %v738 = vpop.f32.mrf.mxu0
  %v739 = vadd.f32 %v702, %v738
  %740 = vmatmul.f32.gmra.mxu0 %v713
  %v741 = vpop.f32.mrf.mxu0
  %v742 = vadd.f32 %v702, %v741
  %743 = vdwg.mxu0
  %v744 = vmul.f32 %v733, %v29
  %v745 = vmul.f32 %v736, %v34
  %v746 = vmul.f32 %v739, %v39
  %v747 = vmul.f32 %v742, %v44
  %vm748 = vcmask 15360
  %749 = vst.msk [vmem:[%s4] sm:$0xff] %vm748, %v744
  %750 = vst.msk [vmem:[%s4 + $0x8] sm:$0xff] %vm748, %v745
  %751 = vst.msk [vmem:[%s4 + $0x10] sm:$0xff] %vm748, %v746
  %752 = vst.msk [vmem:[%s4 + $0x18] sm:$0xff] %vm748, %v747
  // Predicated region
  $region18: #{tpu_custom_call.1} parent=0 // pred_check
    _
  $region19: #{tpu_custom_call.1} parent=0 // pred_check_branch
    %754 = sbr.rel (0) target = $region21
  $region20: #{tpu_custom_call.1} parent=0 // pred_region
    _
  $region21: #{tpu_custom_call.1} parent=0 // pred_fallthru
    _
  // Predicated region
  $region22: #{tpu_custom_call.1} parent=0 // pred_check
    _
  $region23: #{tpu_custom_call.1} parent=0 // pred_check_branch
    %756 = sbr.rel (0) target = $region25
  $region24: #{tpu_custom_call.1} parent=0 // pred_region
    _
  $region25: #{tpu_custom_call.1} parent=0 // pred_fallthru
    _

</llo_original>
